<compile_context>
chip_gen: v7x
topology: tpu7x:2x2x1
jax: 0.10.0
libtpu: 0.0.40
codegen_flags: <defaults>
</compile_context>

<pallas_src>
import jax
import jax.numpy as jnp
from jax.experimental import pallas as pl
from jax.experimental.pallas import tpu as pltpu


STATE_SIZE = 48
ACTION_SIZE = 4
HID = 128
HEAD = 64
LANES = 128
SUBLANES = 8
MAX_BATCH_TILE = 512  # rows per grid step (multiple of 8); fits easily in VMEM.

# Row offsets inside the packed parameter slab.
_W1_OFF = 0      # rows 0..47 = W1, row 48 = b1 (bias-lane trick)
_W2_OFF = 128
_WH1_OFF = 256
_WH2_OFF = 384
_B_OFF = 512     # rows 512..514 = b2, [ba1|bc1], [ba2|bc2]
_SLAB_ROWS = 520  # 512 weight rows + bias rows, padded to a multiple of 8.


def actor_critic_kernel(states_ref, p_ref, out_ref):
    B = out_ref.shape[0]

    lane = jax.lax.broadcasted_iota(jnp.int32, (B, LANES), 1)

    # One-hot encode state ids in-register (states < 48 < 128); lane 48 is a
    # constant 1.0 so W1's row 48 (= b1) folds the first bias add into the MXU.
    x = jnp.logical_or(lane == states_ref[...], lane == STATE_SIZE)
    x = x.astype(jnp.float32)                            # [B, 128]

    w1 = p_ref[_W1_OFF:_W1_OFF + LANES, :]
    w2 = p_ref[_W2_OFF:_W2_OFF + LANES, :]
    wh1 = p_ref[_WH1_OFF:_WH1_OFF + LANES, :]
    wh2 = p_ref[_WH2_OFF:_WH2_OFF + LANES, :]

    bias = p_ref[_B_OFF:_B_OFF + SUBLANES, :]            # aligned [8,128] load
    b2 = bias[0:1, :]
    bh1 = bias[1:2, :]
    bh2 = bias[2:3, :]

    # Shared trunk: Linear(48->128)+ReLU (bias via lane 48), Linear(128->128)+ReLU.
    h = jnp.maximum(jnp.dot(x, w1, preferred_element_type=jnp.float32), 0.0)
    h = jnp.maximum(jnp.dot(h, w2, preferred_element_type=jnp.float32) + b2, 0.0)

    # Fused heads, hidden layer: lanes 0..63 = actor hidden, 64..127 = critic hidden.
    hh = jnp.maximum(jnp.dot(h, wh1, preferred_element_type=jnp.float32) + bh1, 0.0)

    # Fused output layer: lanes 0..3 = actor logits, lane 4 = critic value.
    z = jnp.dot(hh, wh2, preferred_element_type=jnp.float32) + bh2  # [B, 128]

    # Softmax over the 4 logit lanes only.
    is_logit = lane < ACTION_SIZE
    masked = jnp.where(is_logit, z, -jnp.inf)
    m = jnp.max(masked, axis=-1, keepdims=True)
    e = jnp.exp(masked - m)                              # non-logit lanes -> 0
    denom = jnp.sum(e, axis=-1, keepdims=True)
    inv = pl.reciprocal(denom, approx=True)              # EUP slot
    inv = inv * (2.0 - denom * inv)                      # Newton step -> f32 accuracy
    probs = e * inv                                      # zeros outside lanes 0..3

    # Lane-dense output: probs in lanes 0..3, state value in lane 4, zeros elsewhere.
    out_ref[...] = probs + jnp.where(lane == ACTION_SIZE, z, 0.0)


def init_params(key):
    """PyTorch-style uniform(-1/sqrt(fan_in), +1/sqrt(fan_in)) init.

    Weights are stored as [in_features, out_features]; biases as [1, out_features]."""
    dims = [
        (STATE_SIZE, HID),    # shared.0
        (HID, HID),           # shared.2
        (HID, HEAD),          # actor.0
        (HEAD, ACTION_SIZE),  # actor.2
        (HID, HEAD),          # critic.0
        (HEAD, 1),            # critic.2
    ]
    params = []
    for (fan_in, fan_out) in dims:
        key, kw, kb = jax.random.split(key, 3)
        bound = 1.0 / jnp.sqrt(jnp.float32(fan_in))
        w = jax.random.uniform(kw, (fan_in, fan_out), jnp.float32, -bound, bound)
        b = jax.random.uniform(kb, (1, fan_out), jnp.float32, -bound, bound)
        params += [w, b]
    return params


def pack_params(params):
    """One-time fusion/packing of the 12 parameter arrays into a [520, 128] slab."""
    (w1, b1, w2, b2, wa1, ba1, wa2, ba2, wc1, bc1, wc2, bc2) = params
    slab = jnp.zeros((_SLAB_ROWS, LANES), jnp.float32)
    # W1 rows 0..47; b1 in row 48 (one-hot never touches rows >= 48, the kernel
    # sets lane 48 of the input to a constant 1.0).
    slab = slab.at[_W1_OFF:_W1_OFF + STATE_SIZE, :].set(w1)
    slab = slab.at[_W1_OFF + STATE_SIZE, :].set(b1[0])
    slab = slab.at[_W2_OFF:_W2_OFF + HID, :].set(w2)
    # Fused head layer 1: [Wa1 | Wc1].
    slab = slab.at[_WH1_OFF:_WH1_OFF + HID, :HEAD].set(wa1)
    slab = slab.at[_WH1_OFF:_WH1_OFF + HID, HEAD:].set(wc1)
    # Fused head layer 2: block-diagonal (actor rows 0..63 -> lanes 0..3,
    # critic rows 64..127 -> lane 4).
    slab = slab.at[_WH2_OFF:_WH2_OFF + HEAD, :ACTION_SIZE].set(wa2)
    slab = slab.at[_WH2_OFF + HEAD:_WH2_OFF + HID, ACTION_SIZE:ACTION_SIZE + 1].set(wc2)
    # Remaining bias rows.
    slab = slab.at[_B_OFF + 0, :].set(b2[0])
    slab = slab.at[_B_OFF + 1, :HEAD].set(ba1[0])
    slab = slab.at[_B_OFF + 1, HEAD:].set(bc1[0])
    slab = slab.at[_B_OFF + 2, :ACTION_SIZE].set(ba2[0])
    slab = slab.at[_B_OFF + 2, ACTION_SIZE:ACTION_SIZE + 1].set(bc2[0])
    return slab


@jax.jit
def actor_critic_forward(states, packed_params):
    """states: int [B] CliffWalking state ids -> (action_probs [B,4], state_value [B,1])."""
    B = states.shape[0]
    # Pad the batch to a sublane multiple, then to a multiple of the batch tile.
    b8 = max(SUBLANES, ((B + SUBLANES - 1) // SUBLANES) * SUBLANES)
    bt = min(MAX_BATCH_TILE, b8)
    B_pad = ((b8 + bt - 1) // bt) * bt
    states_p = jnp.zeros((B_pad, 1), jnp.int32).at[:B, 0].set(states.astype(jnp.int32))

    out = pl.pallas_call(
        actor_critic_kernel,
        out_shape=jax.ShapeDtypeStruct((B_pad, LANES), jnp.float32),
        grid=(B_pad // bt,),
        in_specs=[
            pl.BlockSpec((bt, 1), lambda i: (i, 0)),
            # Constant block index -> the parameter slab is DMA'd once and
            # stays resident across all batch tiles.
            pl.BlockSpec((_SLAB_ROWS, LANES), lambda i: (0, 0)),
        ],
        out_specs=pl.BlockSpec((bt, LANES), lambda i: (i, 0)),
        compiler_params=pltpu.CompilerParams(dimension_semantics=("parallel",)),
    )(states_p, packed_params)

    probs = out[:B, :ACTION_SIZE]
    value = out[:B, ACTION_SIZE:ACTION_SIZE + 1]
    return probs, value


def reference_forward(x, params):
    (w1, b1, w2, b2, wa1, ba1, wa2, ba2, wc1, bc1, wc2, bc2) = params
    h = jnp.maximum(x @ w1 + b1, 0.0)
    h = jnp.maximum(h @ w2 + b2, 0.0)
    a = jnp.maximum(h @ wa1 + ba1, 0.0)
    probs = jax.nn.softmax(a @ wa2 + ba2, axis=-1)
    c = jnp.maximum(h @ wc1 + bc1, 0.0)
    value = c @ wc2 + bc2
    return probs, value


if __name__ == "__main__":
    key = jax.random.PRNGKey(0)
    key, pkey, skey = jax.random.split(key, 3)

    params = init_params(pkey)
    packed = pack_params(params)

    # Batch of CliffWalking state indices (kernel one-hot-encodes internally).
    B = 2
    states = jax.random.randint(skey, (B,), 0, STATE_SIZE)

    probs, value = actor_critic_forward(states, packed)
    probs = jax.block_until_ready(probs)
    value = jax.block_until_ready(value)

    # Reference: explicit one-hot (state_to_tensor) + unfused MLP.
    x = jax.nn.one_hot(states, STATE_SIZE, dtype=jnp.float32)  # [B, 48]
    ref_probs, ref_value = reference_forward(x, params)

    assert probs.shape == (B, ACTION_SIZE) and value.shape == (B, 1)
    assert jnp.allclose(probs, ref_probs, atol=1e-4, rtol=1e-4)
    assert jnp.allclose(value, ref_value, atol=1e-4, rtol=1e-4)
    assert jnp.allclose(jnp.sum(probs, axis=-1), 1.0, atol=1e-4)

    print("KERNEL_OK")
</pallas_src>

<mosaic_0001>
module attributes {stable_mosaic.version = 11 : i64} {
  func.func @actor_critic_kernel(%arg0: i32, %arg1: memref<8x1xi32, #tpu.memory_space<vmem>>, %arg2: memref<520x128xf32, #tpu.memory_space<vmem>>, %arg3: memref<8x128xf32, #tpu.memory_space<vmem>>) attributes {dimension_semantics = [#tpu.dimension_semantics<parallel>], iteration_bounds = array<i64: 1>, scalar_prefetch = 0 : i64, scratch_operands = 0 : i64, tpu.core_type = #tpu.core_type<tc>, window_params = [{transform_indices = @transform_0, window_bounds = array<i64: 8, 1>}, {pipeline_mode = #tpu.pipeline_mode<synchronous>, transform_indices = @transform_1, window_bounds = array<i64: 520, 128>}, {transform_indices = @transform_2, window_bounds = array<i64: 8, 128>}]} {
    %0 = tpu.iota {dimensions = array<i32: 1>} : vector<8x128xi32>
    %c0 = arith.constant 0 : index
    %c0_0 = arith.constant 0 : index
    %1 = vector.load %arg1[%c0, %c0_0] : memref<8x1xi32, #tpu.memory_space<vmem>>, vector<8x1xi32>
    %2 = vector.broadcast %1 : vector<8x1xi32> to vector<8x128xi32>
    %3 = arith.cmpi eq, %0, %2 : vector<8x128xi32>
    %c48_i32 = arith.constant 48 : i32
    %4 = vector.broadcast %c48_i32 : i32 to vector<8x128xi32>
    %5 = arith.cmpi eq, %0, %4 : vector<8x128xi32>
    %6 = arith.ori %3, %5 : vector<8x128xi1>
    %7 = arith.extui %6 : vector<8x128xi1> to vector<8x128xi32>
    %8 = arith.sitofp %7 : vector<8x128xi32> to vector<8x128xf32>
    %c0_1 = arith.constant 0 : index
    %c0_2 = arith.constant 0 : index
    %9 = vector.load %arg2[%c0_1, %c0_2] : memref<520x128xf32, #tpu.memory_space<vmem>>, vector<128x128xf32>
    %c128 = arith.constant 128 : index
    %c0_3 = arith.constant 0 : index
    %10 = vector.load %arg2[%c128, %c0_3] : memref<520x128xf32, #tpu.memory_space<vmem>>, vector<128x128xf32>
    %c256 = arith.constant 256 : index
    %c0_4 = arith.constant 0 : index
    %11 = vector.load %arg2[%c256, %c0_4] : memref<520x128xf32, #tpu.memory_space<vmem>>, vector<128x128xf32>
    %c384 = arith.constant 384 : index
    %c0_5 = arith.constant 0 : index
    %12 = vector.load %arg2[%c384, %c0_5] : memref<520x128xf32, #tpu.memory_space<vmem>>, vector<128x128xf32>
    %c512 = arith.constant 512 : index
    %c0_6 = arith.constant 0 : index
    %13 = vector.load %arg2[%c512, %c0_6] : memref<520x128xf32, #tpu.memory_space<vmem>>, vector<8x128xf32>
    %14 = vector.extract_strided_slice %13 {offsets = [0, 0], sizes = [1, 128], strides = [1, 1]} : vector<8x128xf32> to vector<1x128xf32>
    %15 = vector.extract_strided_slice %13 {offsets = [1, 0], sizes = [1, 128], strides = [1, 1]} : vector<8x128xf32> to vector<1x128xf32>
    %16 = vector.extract_strided_slice %13 {offsets = [2, 0], sizes = [1, 128], strides = [1, 1]} : vector<8x128xf32> to vector<1x128xf32>
    %cst = arith.constant dense<0.000000e+00> : vector<8x128xf32>
    %17 = tpu.matmul %8, %9, %cst {dimension_numbers = #tpu.dot_dimension_numbers<[1], [0], [0], [1], [0, 0, 1, 1], [], []>} : vector<8x128xf32>, vector<128x128xf32>, vector<8x128xf32> -> vector<8x128xf32>
    %cst_7 = arith.constant 0.000000e+00 : f32
    %18 = vector.broadcast %cst_7 : f32 to vector<8x128xf32>
    %19 = arith.maximumf %17, %18 : vector<8x128xf32>
    %cst_8 = arith.constant dense<0.000000e+00> : vector<8x128xf32>
    %20 = tpu.matmul %19, %10, %cst_8 {dimension_numbers = #tpu.dot_dimension_numbers<[1], [0], [0], [1], [0, 0, 1, 1], [], []>} : vector<8x128xf32>, vector<128x128xf32>, vector<8x128xf32> -> vector<8x128xf32>
    %21 = vector.broadcast %14 : vector<1x128xf32> to vector<8x128xf32>
    %22 = arith.addf %20, %21 : vector<8x128xf32>
    %cst_9 = arith.constant 0.000000e+00 : f32
    %23 = vector.broadcast %cst_9 : f32 to vector<8x128xf32>
    %24 = arith.maximumf %22, %23 : vector<8x128xf32>
    %cst_10 = arith.constant dense<0.000000e+00> : vector<8x128xf32>
    %25 = tpu.matmul %24, %11, %cst_10 {dimension_numbers = #tpu.dot_dimension_numbers<[1], [0], [0], [1], [0, 0, 1, 1], [], []>} : vector<8x128xf32>, vector<128x128xf32>, vector<8x128xf32> -> vector<8x128xf32>
    %26 = vector.broadcast %15 : vector<1x128xf32> to vector<8x128xf32>
    %27 = arith.addf %25, %26 : vector<8x128xf32>
    %cst_11 = arith.constant 0.000000e+00 : f32
    %28 = vector.broadcast %cst_11 : f32 to vector<8x128xf32>
    %29 = arith.maximumf %27, %28 : vector<8x128xf32>
    %cst_12 = arith.constant dense<0.000000e+00> : vector<8x128xf32>
    %30 = tpu.matmul %29, %12, %cst_12 {dimension_numbers = #tpu.dot_dimension_numbers<[1], [0], [0], [1], [0, 0, 1, 1], [], []>} : vector<8x128xf32>, vector<128x128xf32>, vector<8x128xf32> -> vector<8x128xf32>
    %31 = vector.broadcast %16 : vector<1x128xf32> to vector<8x128xf32>
    %32 = arith.addf %30, %31 : vector<8x128xf32>
    %c4_i32 = arith.constant 4 : i32
    %33 = vector.broadcast %c4_i32 : i32 to vector<8x128xi32>
    %34 = arith.cmpi slt, %0, %33 : vector<8x128xi32>
    %cst_13 = arith.constant 0xFF800000 : f32
    %35 = vector.broadcast %cst_13 : f32 to vector<8x128xf32>
    %36 = arith.select %34, %32, %35 : vector<8x128xi1>, vector<8x128xf32>
    %cst_14 = arith.constant dense<0xFF800000> : vector<8xf32>
    %37 = vector.multi_reduction <maximumf>, %36, %cst_14 [1] : vector<8x128xf32> to vector<8xf32>
    %38 = vector.shape_cast %37 : vector<8xf32> to vector<8x1xf32>
    %39 = vector.broadcast %38 : vector<8x1xf32> to vector<8x128xf32>
    %40 = arith.subf %36, %39 : vector<8x128xf32>
    %41 = math.exp %40 : vector<8x128xf32>
    %cst_15 = arith.constant dense<0.000000e+00> : vector<8xf32>
    %42 = vector.multi_reduction <add>, %41, %cst_15 [1] : vector<8x128xf32> to vector<8xf32>
    %43 = vector.shape_cast %42 : vector<8xf32> to vector<8x1xf32>
    %44 = tpu.reciprocal %43 {approx = true} : vector<8x1xf32> -> vector<8x1xf32>
    %45 = arith.mulf %43, %44 : vector<8x1xf32>
    %cst_16 = arith.constant 2.000000e+00 : f32
    %46 = vector.broadcast %cst_16 : f32 to vector<8x1xf32>
    %47 = arith.subf %46, %45 : vector<8x1xf32>
    %48 = arith.mulf %44, %47 : vector<8x1xf32>
    %49 = vector.broadcast %48 : vector<8x1xf32> to vector<8x128xf32>
    %50 = arith.mulf %41, %49 : vector<8x128xf32>
    %c4_i32_17 = arith.constant 4 : i32
    %51 = vector.broadcast %c4_i32_17 : i32 to vector<8x128xi32>
    %52 = arith.cmpi eq, %0, %51 : vector<8x128xi32>
    %cst_18 = arith.constant 0.000000e+00 : f32
    %53 = vector.broadcast %cst_18 : f32 to vector<8x128xf32>
    %54 = arith.select %52, %32, %53 : vector<8x128xi1>, vector<8x128xf32>
    %55 = arith.addf %50, %54 : vector<8x128xf32>
    %c0_19 = arith.constant 0 : index
    %c0_20 = arith.constant 0 : index
    %56 = vector.load %arg3[%c0_19, %c0_20] : memref<8x128xf32, #tpu.memory_space<vmem>>, vector<8x128xf32>
    tpu.vector_store %arg3[%c0_19, %c0_20], %55 {strides = array<i32>} : memref<8x128xf32, #tpu.memory_space<vmem>>, vector<8x128xf32>,
    return
  }
  func.func @transform_0(%arg0: i32) -> (i32, i32) {
    %c0_i32 = arith.constant 0 : i32
    %c0_i32_0 = arith.constant 0 : i32
    return %arg0, %c0_i32 : i32, i32
  }
  func.func @transform_1(%arg0: i32) -> (i32, i32) {
    %c0_i32 = arith.constant 0 : i32
    %c0_i32_0 = arith.constant 0 : i32
    %c0_i32_1 = arith.constant 0 : i32
    return %c0_i32, %c0_i32_0 : i32, i32
  }
  func.func @transform_2(%arg0: i32) -> (i32, i32) {
    %c0_i32 = arith.constant 0 : i32
    %c0_i32_0 = arith.constant 0 : i32
    return %arg0, %c0_i32 : i32, i32
  }
}

</mosaic_0001>

<llo_original>
// kernel: actor_critic_forward.1
$region0: #{actor_critic_forward.1}
  #allocation0 [shape = 'u32[]', space=smem, size = 0x4, offset = 0x4, fixed_abs, tag = 'smem constant byte address 0x4 - core index']
  #allocation1 [shape = 'u32[144,128]{1,0:T(1,128)}', space=vmem, size = 0x12000, scoped, tag = 'internal scratch']
  %s0 = inlined_call_operand.vmem [shape: s32[8,1], index: 0, kind: input, shape index: {}]
  %s1 = inlined_call_operand.hbm [shape: f32[520,128], index: 1, kind: input, shape index: {}]
  %s2 = inlined_call_operand.vmem [shape: f32[8,128], index: 2, kind: output, shape index: {}]
  %s3 = sld [smem:[#allocation0]]
  $region22: #{actor_critic_forward.1} parent=0
    _
  %s5 = ssub.s32 1, %s3
  %s6 = scalar_select 0, %s5, %s3
  $region1: #{actor_critic_forward.1} parent=0
    #allocation2 [shape = 'u8[266240]{0}', space=vmem, size = 0x41000, scoped, tag = 'input window, operand 1, single buffered']
    #allocation3 [shape = 's32[1]{0}', space=sflag, size = 0x4, scoped, tag = 'scoped memory for actor_critic_forward.1']
    %7 = vsyncpa [#allocation3], 0
    // Predicated region
    $region2: #{actor_critic_forward.1} parent=1 // pred_check
      _
    $region3: #{actor_critic_forward.1} parent=1 // pred_check_branch
      %9 = sbr.rel (0) target = $region5
    $region4: #{actor_critic_forward.1} parent=1 // pred_region
      _
    $region5: #{actor_critic_forward.1} parent=1 // pred_fallthru
      _
    // Predicated region
    $region6: #{actor_critic_forward.1} parent=1 // pred_check
      _
    $region7: #{actor_critic_forward.1} parent=1 // pred_check_branch
      %11 = sbr.rel (0) target = $region9
    $region8: #{actor_critic_forward.1} parent=1 // pred_region
      %s13 = ssub.s32 8320, 8320
      %14 = vsyncadd [#allocation3], %s13
      %s15 = sshll.u32 [#allocation2], 4
      %s16 = int_to_ptr.vmem [resolvable:$true] %s15
      %21 = dma.hbm_to_vmem [thread:$0]  %s1, 8320, %s16, [#allocation3], 128, 128, 8
    $region9: #{actor_critic_forward.1} parent=1 // pred_fallthru
      _
    // Predicated region
    $region10: #{actor_critic_forward.1} parent=1 // pred_check
      _
    $region11: #{actor_critic_forward.1} parent=1 // pred_check_branch
      %23 = sbr.rel (0) target = $region13
    $region12: #{actor_critic_forward.1} parent=1 // pred_region
      %24 = dma.done [#allocation3], 8320
    $region13: #{actor_critic_forward.1} parent=1 // pred_fallthru
      _
    %v25 = vlaneseq
    %v26 = vand.u32 %v25, 127
    %v27 = vld [vmem:[%s0] sm:$0xff]
    %28 = vset.pattern.permute.xlu0 0
    %29 = vperm.xlu0 %28, %v27
    %v30 = vpop.permute.xlu0 %29
    %vm31 = vcmp.eq.s32.totalorder %v26, %v30
    %vm32 = vcmp.eq.s32.totalorder %v26, 48
    %vm33 = vmor %vm31, %vm32
    %v34 = vsel %vm33, 1, 0
    %v35 = vcvt.s32.f32 %v34
    %v36 = vld [vmem:[#allocation2] sm:$0xff]
    %v37 = vld [vmem:[#allocation2 + $0x8] sm:$0xff]
    %v38 = vld [vmem:[#allocation2 + $0x10] sm:$0xff]
    %v39 = vld [vmem:[#allocation2 + $0x18] sm:$0xff]
    %v40 = vld [vmem:[#allocation2 + $0x20] sm:$0xff]
    %v41 = vld [vmem:[#allocation2 + $0x28] sm:$0xff]
    %v42 = vld [vmem:[#allocation2 + $0x30] sm:$0xff]
    %v43 = vld [vmem:[#allocation2 + $0x38] sm:$0xff]
    %v44 = vld [vmem:[#allocation2 + $0x40] sm:$0xff]
    %v45 = vld [vmem:[#allocation2 + $0x48] sm:$0xff]
    %v46 = vld [vmem:[#allocation2 + $0x50] sm:$0xff]
    %v47 = vld [vmem:[#allocation2 + $0x58] sm:$0xff]
    %v48 = vld [vmem:[#allocation2 + $0x60] sm:$0xff]
    %v49 = vld [vmem:[#allocation2 + $0x68] sm:$0xff]
    %v50 = vld [vmem:[#allocation2 + $0x70] sm:$0xff]
    %v51 = vld [vmem:[#allocation2 + $0x78] sm:$0xff]
    %v52 = vld [vmem:[#allocation2 + $0x80] sm:$0xff]
    %v53 = vld [vmem:[#allocation2 + $0x88] sm:$0xff]
    %v54 = vld [vmem:[#allocation2 + $0x90] sm:$0xff]
    %v55 = vld [vmem:[#allocation2 + $0x98] sm:$0xff]
    %v56 = vld [vmem:[#allocation2 + $0xa0] sm:$0xff]
    %v57 = vld [vmem:[#allocation2 + $0xa8] sm:$0xff]
    %v58 = vld [vmem:[#allocation2 + $0xb0] sm:$0xff]
    %v59 = vld [vmem:[#allocation2 + $0xb8] sm:$0xff]
    %v60 = vld [vmem:[#allocation2 + $0xc0] sm:$0xff]
    %v61 = vld [vmem:[#allocation2 + $0xc8] sm:$0xff]
    %v62 = vld [vmem:[#allocation2 + $0xd0] sm:$0xff]
    %v63 = vld [vmem:[#allocation2 + $0xd8] sm:$0xff]
    %v64 = vld [vmem:[#allocation2 + $0xe0] sm:$0xff]
    %v65 = vld [vmem:[#allocation2 + $0xe8] sm:$0xff]
    %v66 = vld [vmem:[#allocation2 + $0xf0] sm:$0xff]
    %v67 = vld [vmem:[#allocation2 + $0xf8] sm:$0xff]
    %v68 = vld [vmem:[#allocation2 + $0x100] sm:$0xff]
    %v69 = vld [vmem:[#allocation2 + $0x108] sm:$0xff]
    %v70 = vld [vmem:[#allocation2 + $0x110] sm:$0xff]
    %v71 = vld [vmem:[#allocation2 + $0x118] sm:$0xff]
    %v72 = vld [vmem:[#allocation2 + $0x120] sm:$0xff]
    %v73 = vld [vmem:[#allocation2 + $0x128] sm:$0xff]
    %v74 = vld [vmem:[#allocation2 + $0x130] sm:$0xff]
    %v75 = vld [vmem:[#allocation2 + $0x138] sm:$0xff]
    %v76 = vld [vmem:[#allocation2 + $0x140] sm:$0xff]
    %v77 = vld [vmem:[#allocation2 + $0x148] sm:$0xff]
    %v78 = vld [vmem:[#allocation2 + $0x150] sm:$0xff]
    %v79 = vld [vmem:[#allocation2 + $0x158] sm:$0xff]
    %v80 = vld [vmem:[#allocation2 + $0x160] sm:$0xff]
    %v81 = vld [vmem:[#allocation2 + $0x168] sm:$0xff]
    %v82 = vld [vmem:[#allocation2 + $0x170] sm:$0xff]
    %v83 = vld [vmem:[#allocation2 + $0x178] sm:$0xff]
    %v84 = vld [vmem:[#allocation2 + $0x180] sm:$0xff]
    %v85 = vld [vmem:[#allocation2 + $0x188] sm:$0xff]
    %v86 = vld [vmem:[#allocation2 + $0x190] sm:$0xff]
    %v87 = vld [vmem:[#allocation2 + $0x198] sm:$0xff]
    %v88 = vld [vmem:[#allocation2 + $0x1a0] sm:$0xff]
    %v89 = vld [vmem:[#allocation2 + $0x1a8] sm:$0xff]
    %v90 = vld [vmem:[#allocation2 + $0x1b0] sm:$0xff]
    %v91 = vld [vmem:[#allocation2 + $0x1b8] sm:$0xff]
    %v92 = vld [vmem:[#allocation2 + $0x1c0] sm:$0xff]
    %v93 = vld [vmem:[#allocation2 + $0x1c8] sm:$0xff]
    %v94 = vld [vmem:[#allocation2 + $0x1d0] sm:$0xff]
    %v95 = vld [vmem:[#allocation2 + $0x1d8] sm:$0xff]
    %v96 = vld [vmem:[#allocation2 + $0x1e0] sm:$0xff]
    %v97 = vld [vmem:[#allocation2 + $0x1e8] sm:$0xff]
    %v98 = vld [vmem:[#allocation2 + $0x1f0] sm:$0xff]
    %v99 = vld [vmem:[#allocation2 + $0x1f8] sm:$0xff]
    %v100 = vld [vmem:[#allocation2 + $0x200] sm:$0xff]
    %101 = vmatprep.subr.mxu0 0.0
    %102 = vmatpush1.msra.mxu0 %v36
    %103 = vmatprep.subr.mxu0 0.0
    %104 = vmatpush1.msra.mxu0 %v37
    %105 = vmatprep.subr.mxu0 0.0
    %106 = vmatpush1.msra.mxu0 %v38
    %107 = vmatprep.subr.mxu0 0.0
    %108 = vmatpush1.msra.mxu0 %v39
    %109 = vmatprep.subr.mxu0 0.0
    %110 = vmatpush1.msra.mxu0 %v40
    %111 = vmatprep.subr.mxu0 0.0
    %112 = vmatpush1.msra.mxu0 %v41
    %113 = vmatprep.subr.mxu0 0.0
    %114 = vmatpush1.msra.mxu0 %v42
    %115 = vmatprep.subr.mxu0 0.0
    %116 = vmatpush1.msra.mxu0 %v43
    %117 = vmatprep.subr.mxu0 0.0
    %118 = vmatpush1.msra.mxu0 %v44
    %119 = vmatprep.subr.mxu0 0.0
    %120 = vmatpush1.msra.mxu0 %v45
    %121 = vmatprep.subr.mxu0 0.0
    %122 = vmatpush1.msra.mxu0 %v46
    %123 = vmatprep.subr.mxu0 0.0
    %124 = vmatpush1.msra.mxu0 %v47
    %125 = vmatprep.subr.mxu0 0.0
    %126 = vmatpush1.msra.mxu0 %v48
    %127 = vmatprep.subr.mxu0 0.0
    %128 = vmatpush1.msra.mxu0 %v49
    %129 = vmatprep.subr.mxu0 0.0
    %130 = vmatpush1.msra.mxu0 %v50
    %131 = vmatprep.subr.mxu0 0.0
    %132 = vmatpush1.msra.mxu0 %v51
    %133 = vmatprep.subr.mxu0 0.0
    %134 = vmatpush1.msra.mxu0 0.0
    %135 = vmatprep.subr.mxu0 0.0
    %136 = vmatpush1.msra.mxu0 0.0
    %137 = vmatprep.subr.mxu0 0.0
    %138 = vmatpush1.msra.mxu0 0.0
    %139 = vmatprep.subr.mxu0 0.0
    %140 = vmatpush1.msra.mxu0 0.0
    %141 = vmatprep.subr.mxu0 0.0
    %142 = vmatpush1.msra.mxu0 0.0
    %143 = vmatprep.subr.mxu0 0.0
    %144 = vmatpush1.msra.mxu0 0.0
    %145 = vmatprep.subr.mxu0 0.0
    %146 = vmatpush1.msra.mxu0 0.0
    %147 = vmatprep.subr.mxu0 0.0
    %148 = vmatpush1.msra.mxu0 0.0
    %149 = vmatprep.subr.mxu0 0.0
    %150 = vmatpush1.msra.mxu0 0.0
    %151 = vmatprep.subr.mxu0 0.0
    %152 = vmatpush1.msra.mxu0 0.0
    %153 = vmatprep.subr.mxu0 0.0
    %154 = vmatpush1.msra.mxu0 0.0
    %155 = vmatprep.subr.mxu0 0.0
    %156 = vmatpush1.msra.mxu0 0.0
    %157 = vmatprep.subr.mxu0 0.0
    %158 = vmatpush1.msra.mxu0 0.0
    %159 = vmatprep.subr.mxu0 0.0
    %160 = vmatpush1.msra.mxu0 0.0
    %161 = vmatprep.subr.mxu0 0.0
    %162 = vmatpush1.msra.mxu0 0.0
    %163 = vmatprep.subr.mxu0 0.0
    %164 = vmatpush1.msra.mxu0 0.0
    %165 = vmatprep.mubr.f32.mxu0 0.0
    %166 = vmatmul.mubr.f32.gmra.mrb[0].mxu0 %v35
    %v167 = vpop.f32.mrb[0].mxu0
    %v168 = vadd.f32 0.0, %v167
    %v169 = vpop.f32.mrb[0].mxu0
    %170 = vdwg.mxu0
    %v171 = vmax.f32 %v168, 0.0
    %v172 = vlaneseq
    %v173 = vshrl.u32 %v172, 7
    %v174 = vsub.s32 0, %v173
    %v175 = vrot.slane %v100, %v174
    %176 = vmatprep.subr.mxu0 0.0
    %177 = vmatpush1.msra.mxu0 %v52
    %178 = vmatprep.subr.mxu0 0.0
    %179 = vmatpush1.msra.mxu0 %v53
    %180 = vmatprep.subr.mxu0 0.0
    %181 = vmatpush1.msra.mxu0 %v54
    %182 = vmatprep.subr.mxu0 0.0
    %183 = vmatpush1.msra.mxu0 %v55
    %184 = vmatprep.subr.mxu0 0.0
    %185 = vmatpush1.msra.mxu0 %v56
    %186 = vmatprep.subr.mxu0 0.0
    %187 = vmatpush1.msra.mxu0 %v57
    %188 = vmatprep.subr.mxu0 0.0
    %189 = vmatpush1.msra.mxu0 %v58
    %190 = vmatprep.subr.mxu0 0.0
    %191 = vmatpush1.msra.mxu0 %v59
    %192 = vmatprep.subr.mxu0 0.0
    %193 = vmatpush1.msra.mxu0 %v60
    %194 = vmatprep.subr.mxu0 0.0
    %195 = vmatpush1.msra.mxu0 %v61
    %196 = vmatprep.subr.mxu0 0.0
    %197 = vmatpush1.msra.mxu0 %v62
    %198 = vmatprep.subr.mxu0 0.0
    %199 = vmatpush1.msra.mxu0 %v63
    %200 = vmatprep.subr.mxu0 0.0
    %201 = vmatpush1.msra.mxu0 %v64
    %202 = vmatprep.subr.mxu0 0.0
    %203 = vmatpush1.msra.mxu0 %v65
    %204 = vmatprep.subr.mxu0 0.0
    %205 = vmatpush1.msra.mxu0 %v66
    %206 = vmatprep.subr.mxu0 0.0
    %207 = vmatpush1.msra.mxu0 %v67
    %208 = vmatprep.subr.mxu0 0.0
    %209 = vmatpush1.msra.mxu0 0.0
    %210 = vmatprep.subr.mxu0 0.0
    %211 = vmatpush1.msra.mxu0 0.0
    %212 = vmatprep.subr.mxu0 0.0
    %213 = vmatpush1.msra.mxu0 0.0
    %214 = vmatprep.subr.mxu0 0.0
    %215 = vmatpush1.msra.mxu0 0.0
    %216 = vmatprep.subr.mxu0 0.0
    %217 = vmatpush1.msra.mxu0 0.0
    %218 = vmatprep.subr.mxu0 0.0
    %219 = vmatpush1.msra.mxu0 0.0
    %220 = vmatprep.subr.mxu0 0.0
    %221 = vmatpush1.msra.mxu0 0.0
    %222 = vmatprep.subr.mxu0 0.0
    %223 = vmatpush1.msra.mxu0 0.0
    %224 = vmatprep.subr.mxu0 0.0
    %225 = vmatpush1.msra.mxu0 0.0
    %226 = vmatprep.subr.mxu0 0.0
    %227 = vmatpush1.msra.mxu0 0.0
    %228 = vmatprep.subr.mxu0 0.0
    %229 = vmatpush1.msra.mxu0 0.0
    %230 = vmatprep.subr.mxu0 0.0
    %231 = vmatpush1.msra.mxu0 0.0
    %232 = vmatprep.subr.mxu0 0.0
    %233 = vmatpush1.msra.mxu0 0.0
    %234 = vmatprep.subr.mxu0 0.0
    %235 = vmatpush1.msra.mxu0 0.0
    %236 = vmatprep.subr.mxu0 0.0
    %237 = vmatpush1.msra.mxu0 0.0
    %238 = vmatprep.subr.mxu0 0.0
    %239 = vmatpush1.msra.mxu0 0.0
    %240 = vmatprep.mubr.f32.mxu0 0.0
    %241 = vmatmul.mubr.f32.gmra.mrb[0].mxu0 %v171
    %v242 = vpop.f32.mrb[0].mxu0
    %v243 = vadd.f32 %v175, %v242
    %v244 = vpop.f32.mrb[0].mxu0
    %245 = vdwg.mxu0
    %v246 = vmax.f32 %v243, 0.0
    %v247 = vlaneseq
    %v248 = vshrl.u32 %v247, 7
    %v249 = vsub.s32 1, %v248
    %v250 = vrot.slane %v100, %v249
    %251 = vmatprep.subr.mxu0 0.0
    %252 = vmatpush1.msra.mxu0 %v68
    %253 = vmatprep.subr.mxu0 0.0
    %254 = vmatpush1.msra.mxu0 %v69
    %255 = vmatprep.subr.mxu0 0.0
    %256 = vmatpush1.msra.mxu0 %v70
    %257 = vmatprep.subr.mxu0 0.0
    %258 = vmatpush1.msra.mxu0 %v71
    %259 = vmatprep.subr.mxu0 0.0
    %260 = vmatpush1.msra.mxu0 %v72
    %261 = vmatprep.subr.mxu0 0.0
    %262 = vmatpush1.msra.mxu0 %v73
    %263 = vmatprep.subr.mxu0 0.0
    %264 = vmatpush1.msra.mxu0 %v74
    %265 = vmatprep.subr.mxu0 0.0
    %266 = vmatpush1.msra.mxu0 %v75
    %267 = vmatprep.subr.mxu0 0.0
    %268 = vmatpush1.msra.mxu0 %v76
    %269 = vmatprep.subr.mxu0 0.0
    %270 = vmatpush1.msra.mxu0 %v77
    %271 = vmatprep.subr.mxu0 0.0
    %272 = vmatpush1.msra.mxu0 %v78
    %273 = vmatprep.subr.mxu0 0.0
    %274 = vmatpush1.msra.mxu0 %v79
    %275 = vmatprep.subr.mxu0 0.0
    %276 = vmatpush1.msra.mxu0 %v80
    %277 = vmatprep.subr.mxu0 0.0
    %278 = vmatpush1.msra.mxu0 %v81
    %279 = vmatprep.subr.mxu0 0.0
    %280 = vmatpush1.msra.mxu0 %v82
    %281 = vmatprep.subr.mxu0 0.0
    %282 = vmatpush1.msra.mxu0 %v83
    %283 = vmatprep.subr.mxu0 0.0
    %284 = vmatpush1.msra.mxu0 0.0
    %285 = vmatprep.subr.mxu0 0.0
    %286 = vmatpush1.msra.mxu0 0.0
    %287 = vmatprep.subr.mxu0 0.0
    %288 = vmatpush1.msra.mxu0 0.0
    %289 = vmatprep.subr.mxu0 0.0
    %290 = vmatpush1.msra.mxu0 0.0
    %291 = vmatprep.subr.mxu0 0.0
    %292 = vmatpush1.msra.mxu0 0.0
    %293 = vmatprep.subr.mxu0 0.0
    %294 = vmatpush1.msra.mxu0 0.0
    %295 = vmatprep.subr.mxu0 0.0
    %296 = vmatpush1.msra.mxu0 0.0
    %297 = vmatprep.subr.mxu0 0.0
    %298 = vmatpush1.msra.mxu0 0.0
    %299 = vmatprep.subr.mxu0 0.0
    %300 = vmatpush1.msra.mxu0 0.0
    %301 = vmatprep.subr.mxu0 0.0
    %302 = vmatpush1.msra.mxu0 0.0
    %303 = vmatprep.subr.mxu0 0.0
    %304 = vmatpush1.msra.mxu0 0.0
    %305 = vmatprep.subr.mxu0 0.0
    %306 = vmatpush1.msra.mxu0 0.0
    %307 = vmatprep.subr.mxu0 0.0
    %308 = vmatpush1.msra.mxu0 0.0
    %309 = vmatprep.subr.mxu0 0.0
    %310 = vmatpush1.msra.mxu0 0.0
    %311 = vmatprep.subr.mxu0 0.0
    %312 = vmatpush1.msra.mxu0 0.0
    %313 = vmatprep.subr.mxu0 0.0
    %314 = vmatpush1.msra.mxu0 0.0
    %315 = vmatprep.mubr.f32.mxu0 0.0
    %316 = vmatmul.mubr.f32.gmra.mrb[0].mxu0 %v246
    %v317 = vpop.f32.mrb[0].mxu0
    %v318 = vadd.f32 %v250, %v317
    %v319 = vpop.f32.mrb[0].mxu0
    %320 = vdwg.mxu0
    %v321 = vmax.f32 %v318, 0.0
    %v322 = vlaneseq
    %v323 = vshrl.u32 %v322, 7
    %v324 = vsub.s32 2, %v323
    %v325 = vrot.slane %v100, %v324
    %326 = vmatprep.subr.mxu0 0.0
    %327 = vmatpush1.msra.mxu0 %v84
    %328 = vmatprep.subr.mxu0 0.0
    %329 = vmatpush1.msra.mxu0 %v85
    %330 = vmatprep.subr.mxu0 0.0
    %331 = vmatpush1.msra.mxu0 %v86
    %332 = vmatprep.subr.mxu0 0.0
    %333 = vmatpush1.msra.mxu0 %v87
    %334 = vmatprep.subr.mxu0 0.0
    %335 = vmatpush1.msra.mxu0 %v88
    %336 = vmatprep.subr.mxu0 0.0
    %337 = vmatpush1.msra.mxu0 %v89
    %338 = vmatprep.subr.mxu0 0.0
    %339 = vmatpush1.msra.mxu0 %v90
    %340 = vmatprep.subr.mxu0 0.0
    %341 = vmatpush1.msra.mxu0 %v91
    %342 = vmatprep.subr.mxu0 0.0
    %343 = vmatpush1.msra.mxu0 %v92
    %344 = vmatprep.subr.mxu0 0.0
    %345 = vmatpush1.msra.mxu0 %v93
    %346 = vmatprep.subr.mxu0 0.0
    %347 = vmatpush1.msra.mxu0 %v94
    %348 = vmatprep.subr.mxu0 0.0
    %349 = vmatpush1.msra.mxu0 %v95
    %350 = vmatprep.subr.mxu0 0.0
    %351 = vmatpush1.msra.mxu0 %v96
    %352 = vmatprep.subr.mxu0 0.0
    %353 = vmatpush1.msra.mxu0 %v97
    %354 = vmatprep.subr.mxu0 0.0
    %355 = vmatpush1.msra.mxu0 %v98
    %356 = vmatprep.subr.mxu0 0.0
    %357 = vmatpush1.msra.mxu0 %v99
    %358 = vmatprep.subr.mxu0 0.0
    %359 = vmatpush1.msra.mxu0 0.0
    %360 = vmatprep.subr.mxu0 0.0
    %361 = vmatpush1.msra.mxu0 0.0
    %362 = vmatprep.subr.mxu0 0.0
    %363 = vmatpush1.msra.mxu0 0.0
    %364 = vmatprep.subr.mxu0 0.0
    %365 = vmatpush1.msra.mxu0 0.0
    %366 = vmatprep.subr.mxu0 0.0
    %367 = vmatpush1.msra.mxu0 0.0
    %368 = vmatprep.subr.mxu0 0.0
    %369 = vmatpush1.msra.mxu0 0.0
    %370 = vmatprep.subr.mxu0 0.0
    %371 = vmatpush1.msra.mxu0 0.0
    %372 = vmatprep.subr.mxu0 0.0
    %373 = vmatpush1.msra.mxu0 0.0
    %374 = vmatprep.subr.mxu0 0.0
    %375 = vmatpush1.msra.mxu0 0.0
    %376 = vmatprep.subr.mxu0 0.0
    %377 = vmatpush1.msra.mxu0 0.0
    %378 = vmatprep.subr.mxu0 0.0
    %379 = vmatpush1.msra.mxu0 0.0
    %380 = vmatprep.subr.mxu0 0.0
    %381 = vmatpush1.msra.mxu0 0.0
    %382 = vmatprep.subr.mxu0 0.0
    %383 = vmatpush1.msra.mxu0 0.0
    %384 = vmatprep.subr.mxu0 0.0
    %385 = vmatpush1.msra.mxu0 0.0
    %386 = vmatprep.subr.mxu0 0.0
    %387 = vmatpush1.msra.mxu0 0.0
    %388 = vmatprep.subr.mxu0 0.0
    %389 = vmatpush1.msra.mxu0 0.0
    %390 = vmatprep.mubr.f32.mxu0 0.0
    %391 = vmatmul.mubr.f32.gmra.mrb[0].mxu0 %v321
    %v392 = vpop.f32.mrb[0].mxu0
    %v393 = vadd.f32 %v325, %v392
    %v394 = vpop.f32.mrb[0].mxu0
    %395 = vdwg.mxu0
    %vm396 = vcmp.lt.s32.totalorder %v26, 4
    %v397 = vsel %vm396, %v393, -inf
    %398 = vmax.xlane.f32.xlu0 %v397
    %v399 = vpop.xlane.xlu0 %398
    %v400 = vsub.f32 %v397, %v399
    %v401 = vmul.f32 %v400, 1.442695
    %v402 = vpow.pop %v401
    %403 = vadd.xlane.f32.xlu0 %v402
    %v404 = vpop.xlane.xlu0 %403
    %v405 = vrcp.pop %v404
    %v406 = vmul.f32 %v404, %v405
    %v407 = vsub.f32 2.0, %v406
    %v408 = vmul.f32 %v405, %v407
    %v409 = vmul.f32 %v402, %v408
    %vm410 = vcmp.eq.s32.totalorder %v26, 4
    %v411 = vsel %vm410, %v393, 0.0
    %v412 = vadd.f32 %v409, %v411
    %413 = vst [vmem:[%s2] sm:$0xff] %v412
    // Predicated region
    $region14: #{actor_critic_forward.1} parent=1 // pred_check
      _
    $region15: #{actor_critic_forward.1} parent=1 // pred_check_branch
      %415 = sbr.rel (0) target = $region17
    $region16: #{actor_critic_forward.1} parent=1 // pred_region
      _
    $region17: #{actor_critic_forward.1} parent=1 // pred_fallthru
      _
    // Predicated region
    $region18: #{actor_critic_forward.1} parent=1 // pred_check
      _
    $region19: #{actor_critic_forward.1} parent=1 // pred_check_branch
      %417 = sbr.rel (0) target = $region21
    $region20: #{actor_critic_forward.1} parent=1 // pred_region
      _
    $region21: #{actor_critic_forward.1} parent=1 // pred_fallthru
      _
    %418 = vsyncpa [#allocation3], 1

</llo_original>
